<compile_context>
chip_gen: v7x
topology: tpu7x:2x2x1
jax: 0.10.0
libtpu: 0.0.40
codegen_flags: <defaults>
</compile_context>

<pallas_src>
import jax
import jax.numpy as jnp
from jax import lax
from jax.experimental import pallas as pl
from jax.experimental.pallas import tpu as pltpu

QINT8_MIN, QINT8_MAX = -128.0, 127.0    # torch.qint8  (weight codes)
QUINT8_MIN, QUINT8_MAX = 0.0, 255.0     # torch.quint8 (activation / output codes)


# ----------------------------- Pallas kernel -------------------------------
def qlinear_kernel(s_ref, w_ref, a_ref, c_ref, out_ref):
    """One M-tile of qF.linear: MXU matmul on integer codes -> fused requant."""
    s = s_ref[0]                                          # fused multiplier (SMEM)
    a = a_ref[...].astype(jnp.bfloat16)                   # (tm, K) codes -> bf16, exact
    # W'(OC, K) contracted with A(tm, K) over K (rhs-transposed MXU pattern)
    # -> (OC, tm) f32 accumulator with exact integer sums.
    acc = lax.dot_general(
        w_ref[...], a,
        dimension_numbers=(((1,), (1,)), ((), ())),
        preferred_element_type=jnp.float32)
    q = jnp.round(acc * s + c_ref[...])                   # c: (OC, 1) lane-broadcast
    out_ref[...] = jnp.clip(q, QUINT8_MIN, QUINT8_MAX).astype(jnp.bfloat16)


# ------------------------------ wrapper / glue ------------------------------
def qlinear_pallas(x_q, x_scale, x_zp, w_q, w_scale, w_zp, bias,
                   out_scale, out_zp, tm_max=512):
    """Quantized linear (qF.linear semantics). Integer codes carried as floats.

    x_q:  (..., K) quint8 codes, w_q: (OC, K) qint8 codes, bias: (OC,) float.
    Returns (..., OC) quint8 output codes stored as int32.
    """
    lead_shape = x_q.shape[:-1]
    K = x_q.shape[-1]
    OC = w_q.shape[0]

    A = x_q.reshape(-1, K)                                # (M, K) codes, native dtype
    M = A.shape[0]

    # M tile: >= 128 (lane-dense output stores), capped at tm_max. Padding is
    # only materialised when M does not divide the tile.
    tm = min(tm_max, ((M + 127) // 128) * 128)
    grid_m = pl.cdiv(M, tm)
    M_pad = grid_m * tm
    if M_pad != M:
        A = jnp.pad(A, ((0, M_pad - M), (0, 0)))          # zero codes -> discarded cols

    # Zero-point-folded resident weight codes (exact integers, |.| <= 255).
    Wp = (w_q - w_zp).astype(jnp.bfloat16)                # (OC, K)
    colsum = jnp.sum(w_q - w_zp, axis=1)                  # (OC,)

    inv_out_scale = 1.0 / out_scale
    s = jnp.asarray(x_scale * w_scale * inv_out_scale, jnp.float32).reshape(1)
    c = ((bias - x_scale * w_scale * x_zp * colsum) * inv_out_scale + out_zp)
    c = c.reshape(OC, 1).astype(jnp.float32)              # per-channel constant

    out_t = pl.pallas_call(
        qlinear_kernel,
        out_shape=jax.ShapeDtypeStruct((OC, M_pad), jnp.bfloat16),
        grid=(grid_m,),
        in_specs=[
            pl.BlockSpec(memory_space=pltpu.MemorySpace.SMEM),  # fused scale s
            pl.BlockSpec((OC, K), lambda i: (0, 0)),            # weight codes (resident)
            pl.BlockSpec((tm, K), lambda i: (i, 0)),            # activation codes tile
            pl.BlockSpec((OC, 1), lambda i: (0, 0)),            # per-channel constant
        ],
        out_specs=pl.BlockSpec((OC, tm), lambda i: (0, i)),     # lane-dense in M
        compiler_params=pltpu.CompilerParams(dimension_semantics=("parallel",)),
    )(s, Wp, A, c)

    # back to (..., OC); quint8 codes returned as int32 for the consumer
    # (one small fused transpose+cast -- the price of lane-dense kernel stores).
    codes = out_t[:, :M].T.astype(jnp.int32)
    return codes.reshape(*lead_shape, OC)


# ----------------------- quantization helper functions ----------------------
def assym_scale_offset(data, q_min, q_max):
    d_min = jnp.min(data)
    d_max = jnp.max(data)
    scale = (d_max - d_min) / (q_max - q_min)
    offset = q_min - d_min / scale
    return scale, offset


def quantize_per_tensor(x, scale, zp, q_min, q_max):
    return jnp.clip(jnp.round(x / scale) + zp, q_min, q_max)


# ---------------------------------- main ------------------------------------
if __name__ == "__main__":
    key = jax.random.PRNGKey(0)
    kx, kw, kb = jax.random.split(key, 3)

    # Module config (small): Linear(32 -> 64), input X of shape (2, 8, 32)
    B, S, IN, OUT = 2, 8, 32, 64

    lin_w = jax.random.normal(kw, (OUT, IN), jnp.float32) * 0.1
    lin_b = 0.1 * jax.random.normal(kb, (OUT,), jnp.float32)

    # ---- QLinear.__init__: quantize the Linear weight (qint8) ----
    w_scale, w_off = assym_scale_offset(lin_w, QINT8_MIN, QINT8_MAX)
    w_zp = jnp.round(w_off)
    w_q = quantize_per_tensor(lin_w, w_scale, w_zp, QINT8_MIN, QINT8_MAX)

    # ---- quantized input X (quint8), as produced by an upstream quant stub ----
    x_f = jax.random.normal(kx, (B, S, IN), jnp.float32)
    x_scale, x_off = assym_scale_offset(x_f, QUINT8_MIN, QUINT8_MAX)
    x_zp = jnp.round(x_off)
    x_q = quantize_per_tensor(x_f, x_scale, x_zp, QUINT8_MIN, QUINT8_MAX)
    x_dq = (x_q - x_zp) * x_scale                          # X.dequantize()

    # ---- calibration (first forward): activation = Linear(X.dequantize()) ----
    # One-time stats collection -> plain JAX glue.
    # TODO(synk): the Q base class' stateful running min/max bookkeeping
    # (set_activation_tensor_assym_scale_offset across calls) has no kernel
    # equivalent; it is computed once here.
    act = x_dq @ lin_w.T + lin_b
    act_scale, act_off = assym_scale_offset(act, QUINT8_MIN, QUINT8_MAX)
    act_zp = jnp.round(act_off)

    # ---- hot path: qF.linear(X, w_q, b, scale, zero_point) in Pallas ----
    # TODO(synk): exact fbgemm integer-requantization rounding is not
    # reproduced; float round matches to within 1 LSB.
    out_q = qlinear_pallas(x_q, x_scale, x_zp, w_q, w_scale, w_zp, lin_b,
                           act_scale, act_zp)
    out_q = jax.block_until_ready(out_q)

    # ---- pure-JAX reference for sanity ----
    w_dq = (w_q - w_zp) * w_scale
    ref_f = x_dq @ w_dq.T + lin_b
    ref_q = jnp.clip(jnp.round(ref_f / act_scale + act_zp),
                     QUINT8_MIN, QUINT8_MAX).astype(jnp.int32)

    assert out_q.shape == (B, S, OUT), out_q.shape
    max_diff = int(jnp.max(jnp.abs(out_q - ref_q)))
    assert max_diff <= 1, f"mismatch vs reference: max |diff| = {max_diff}"
    print("KERNEL_OK")
</pallas_src>

<mosaic_0001>
module attributes {stable_mosaic.version = 11 : i64} {
  func.func @qlinear_kernel(%arg0: i32, %arg1: memref<1xf32, #tpu.memory_space<smem>>, %arg2: memref<64x32xbf16, #tpu.memory_space<vmem>>, %arg3: memref<128x32xf32, #tpu.memory_space<vmem>>, %arg4: memref<64x1xf32, #tpu.memory_space<vmem>>, %arg5: memref<64x128xbf16, #tpu.memory_space<vmem>>) attributes {dimension_semantics = [#tpu.dimension_semantics<parallel>], iteration_bounds = array<i64: 1>, scalar_prefetch = 0 : i64, scratch_operands = 0 : i64, tpu.core_type = #tpu.core_type<tc>, window_params = [{transform_indices = @transform_0, window_bounds = array<i64: 1>}, {pipeline_mode = #tpu.pipeline_mode<synchronous>, transform_indices = @transform_1, window_bounds = array<i64: 64, 32>}, {transform_indices = @transform_2, window_bounds = array<i64: 128, 32>}, {pipeline_mode = #tpu.pipeline_mode<synchronous>, transform_indices = @transform_3, window_bounds = array<i64: 64, 1>}, {transform_indices = @transform_4, window_bounds = array<i64: 64, 128>}]} {
    %c0 = arith.constant 0 : index
    %0 = memref.load %arg1[%c0] : memref<1xf32, #tpu.memory_space<smem>>
    %c0_0 = arith.constant 0 : index
    %c0_1 = arith.constant 0 : index
    %1 = vector.load %arg3[%c0_0, %c0_1] : memref<128x32xf32, #tpu.memory_space<vmem>>, vector<128x32xf32>
    %2 = arith.truncf %1 : vector<128x32xf32> to vector<128x32xbf16>
    %c0_2 = arith.constant 0 : index
    %c0_3 = arith.constant 0 : index
    %3 = vector.load %arg2[%c0_2, %c0_3] : memref<64x32xbf16, #tpu.memory_space<vmem>>, vector<64x32xbf16>
    %cst = arith.constant dense<0.000000e+00> : vector<64x128xf32>
    %4 = tpu.matmul %3, %2, %cst {dimension_numbers = #tpu.dot_dimension_numbers<[1], [1], [0], [0], [0, 0, 1, 0], [], []>} : vector<64x32xbf16>, vector<128x32xbf16>, vector<64x128xf32> -> vector<64x128xf32>
    %5 = vector.broadcast %0 : f32 to vector<64x128xf32>
    %6 = arith.mulf %4, %5 : vector<64x128xf32>
    %c0_4 = arith.constant 0 : index
    %c0_5 = arith.constant 0 : index
    %7 = vector.load %arg4[%c0_4, %c0_5] : memref<64x1xf32, #tpu.memory_space<vmem>>, vector<64x1xf32>
    %8 = vector.broadcast %7 : vector<64x1xf32> to vector<64x128xf32>
    %9 = arith.addf %6, %8 : vector<64x128xf32>
    %10 = math.roundeven %9 : vector<64x128xf32>
    %cst_6 = arith.constant 0.000000e+00 : f32
    %cst_7 = arith.constant 2.550000e+02 : f32
    %11 = vector.broadcast %cst_6 : f32 to vector<64x128xf32>
    %12 = arith.maximumf %11, %10 : vector<64x128xf32>
    %13 = vector.broadcast %cst_7 : f32 to vector<64x128xf32>
    %14 = arith.minimumf %13, %12 : vector<64x128xf32>
    %15 = arith.truncf %14 : vector<64x128xf32> to vector<64x128xbf16>
    %c0_8 = arith.constant 0 : index
    %c0_9 = arith.constant 0 : index
    %16 = vector.load %arg5[%c0_8, %c0_9] : memref<64x128xbf16, #tpu.memory_space<vmem>>, vector<64x128xbf16>
    tpu.vector_store %arg5[%c0_8, %c0_9], %15 {strides = array<i32>} : memref<64x128xbf16, #tpu.memory_space<vmem>>, vector<64x128xbf16>,
    return
  }
  func.func @transform_0(%arg0: i32) -> i32 {
    %c0_i32 = arith.constant 0 : i32
    %c0_i32_0 = arith.constant 0 : i32
    return %c0_i32 : i32
  }
  func.func @transform_1(%arg0: i32) -> (i32, i32) {
    %c0_i32 = arith.constant 0 : i32
    %c0_i32_0 = arith.constant 0 : i32
    %c0_i32_1 = arith.constant 0 : i32
    return %c0_i32, %c0_i32_0 : i32, i32
  }
  func.func @transform_2(%arg0: i32) -> (i32, i32) {
    %c0_i32 = arith.constant 0 : i32
    %c0_i32_0 = arith.constant 0 : i32
    return %arg0, %c0_i32 : i32, i32
  }
  func.func @transform_3(%arg0: i32) -> (i32, i32) {
    %c0_i32 = arith.constant 0 : i32
    %c0_i32_0 = arith.constant 0 : i32
    %c0_i32_1 = arith.constant 0 : i32
    return %c0_i32, %c0_i32_0 : i32, i32
  }
  func.func @transform_4(%arg0: i32) -> (i32, i32) {
    %c0_i32 = arith.constant 0 : i32
    %c0_i32_0 = arith.constant 0 : i32
    return %c0_i32, %arg0 : i32, i32
  }
}

</mosaic_0001>

<llo_original>
// kernel: tpu_custom_call.1
$region0: #{tpu_custom_call.1}
  #allocation0 [shape = 'u32[]', space=smem, size = 0x4, offset = 0x4, fixed_abs, tag = 'smem constant byte address 0x4 - core index']
  #allocation1 [shape = 'u32[144,128]{1,0:T(1,128)}', space=vmem, size = 0x12000, scoped, tag = 'internal scratch']
  #allocation2 [shape = 'f32[1]{0:T(128)S(6)}', space=smem, size = 0x200, scoped, tag = 'scoped memory for tpu_custom_call.1']
  %s0 = inlined_call_operand.<no memory space> [shape: f32[1], index: 0, kind: input, shape index: {}]
  %s1 = inlined_call_operand.vmem [shape: bf16[64,32], index: 1, kind: input, shape index: {}]
  %s2 = inlined_call_operand.vmem [shape: f32[128,32], index: 2, kind: input, shape index: {}]
  %s3 = inlined_call_operand.vmem [shape: f32[64,1], index: 3, kind: input, shape index: {}]
  %s4 = inlined_call_operand.hbm [shape: bf16[64,128], index: 4, kind: output, shape index: {}]
  %s5 = sld [smem:[#allocation0]]
  $region26: #{tpu_custom_call.1} parent=0
    _
  %s7 = ssub.s32 1, %s5
  %s8 = scalar_select 0, %s7, %s5
  %9 = sst [smem:[#allocation2]] %s0
  $region1: #{tpu_custom_call.1} parent=0
    #allocation3 [shape = 'u8[16384]{0}', space=vmem, size = 0x4000, scoped, tag = 'output window, operand 0, single buffered']
    #allocation4 [shape = 's32[1]{0}', space=sflag, size = 0x4, scoped, tag = 'scoped memory for tpu_custom_call.1']
    %10 = vsyncpa [#allocation4], 0
    // Predicated region
    $region2: #{tpu_custom_call.1} parent=1 // pred_check
      _
    $region3: #{tpu_custom_call.1} parent=1 // pred_check_branch
      %12 = sbr.rel (0) target = $region5
    $region4: #{tpu_custom_call.1} parent=1 // pred_region
      _
    $region5: #{tpu_custom_call.1} parent=1 // pred_fallthru
      _
    // Predicated region
    $region6: #{tpu_custom_call.1} parent=1 // pred_check
      _
    $region7: #{tpu_custom_call.1} parent=1 // pred_check_branch
      %14 = sbr.rel (0) target = $region9
    $region8: #{tpu_custom_call.1} parent=1 // pred_region
      _
    $region9: #{tpu_custom_call.1} parent=1 // pred_fallthru
      _
    // Predicated region
    $region10: #{tpu_custom_call.1} parent=1 // pred_check
      _
    $region11: #{tpu_custom_call.1} parent=1 // pred_check_branch
      %16 = sbr.rel (0) target = $region13
    $region12: #{tpu_custom_call.1} parent=1 // pred_region
      _
    $region13: #{tpu_custom_call.1} parent=1 // pred_fallthru
      _
    // Predicated region
    $region14: #{tpu_custom_call.1} parent=1 // pred_check
      _
    $region15: #{tpu_custom_call.1} parent=1 // pred_check_branch
      %18 = sbr.rel (0) target = $region17
    $region16: #{tpu_custom_call.1} parent=1 // pred_region
      _
    $region17: #{tpu_custom_call.1} parent=1 // pred_fallthru
      _
    %s20 = sld [smem:[#allocation2]]
    %v21 = vld [vmem:[%s2] sm:$0xff]
    %v22 = vld [vmem:[%s2 + $0x8] sm:$0xff]
    %v23 = vld [vmem:[%s2 + $0x10] sm:$0xff]
    %v24 = vld [vmem:[%s2 + $0x18] sm:$0xff]
    %v25 = vld [vmem:[%s2 + $0x20] sm:$0xff]
    %v26 = vld [vmem:[%s2 + $0x28] sm:$0xff]
    %v27 = vld [vmem:[%s2 + $0x30] sm:$0xff]
    %v28 = vld [vmem:[%s2 + $0x38] sm:$0xff]
    %v29 = vld [vmem:[%s2 + $0x40] sm:$0xff]
    %v30 = vld [vmem:[%s2 + $0x48] sm:$0xff]
    %v31 = vld [vmem:[%s2 + $0x50] sm:$0xff]
    %v32 = vld [vmem:[%s2 + $0x58] sm:$0xff]
    %v33 = vld [vmem:[%s2 + $0x60] sm:$0xff]
    %v34 = vld [vmem:[%s2 + $0x68] sm:$0xff]
    %v35 = vld [vmem:[%s2 + $0x70] sm:$0xff]
    %v36 = vld [vmem:[%s2 + $0x78] sm:$0xff]
    %v37 = vpack.c.bf16 %v22, %v21
    %v38 = vpack.c.bf16 %v24, %v23
    %v39 = vpack.c.bf16 %v26, %v25
    %v40 = vpack.c.bf16 %v28, %v27
    %v41 = vpack.c.bf16 %v30, %v29
    %v42 = vpack.c.bf16 %v32, %v31
    %v43 = vpack.c.bf16 %v34, %v33
    %v44 = vpack.c.bf16 %v36, %v35
    %v45 = vld [vmem:[%s1] sm:$0xf]
    %v46 = vld [vmem:[%s1 + $0x4] sm:$0xf]
    %v47 = vld [vmem:[%s1 + $0x8] sm:$0xf]
    %v48 = vld [vmem:[%s1 + $0xc] sm:$0xf]
    %v49 = vld [vmem:[%s1 + $0x10] sm:$0xf]
    %v50 = vld [vmem:[%s1 + $0x14] sm:$0xf]
    %v51 = vld [vmem:[%s1 + $0x18] sm:$0xf]
    %v52 = vld [vmem:[%s1 + $0x1c] sm:$0xf]
    %v61 = vunpack.c.l.b16 %v45
    %v62 = vunpack.c.l.b16 %v46
    %v63 = vunpack.c.l.b16 %v47
    %v64 = vunpack.c.l.b16 %v48
    %v65 = vunpack.c.l.b16 %v49
    %v66 = vunpack.c.l.b16 %v50
    %v67 = vunpack.c.l.b16 %v51
    %v68 = vunpack.c.l.b16 %v52
    %v69 = vpack.c.b16 %v62, %v61
    %v70 = vpack.c.b16 %v64, %v63
    %v71 = vpack.c.b16 %v66, %v65
    %v72 = vpack.c.b16 %v68, %v67
    %vm73 = vcmask 261120
    %v75 = vsel %vm73, %v69, 0
    %v78 = vsel %vm73, %v70, 0
    %v81 = vsel %vm73, %v71, 0
    %v84 = vsel %vm73, %v72, 0
    %v87 = vsel %vm73, %v37, 0
    %v90 = vsel %vm73, %v38, 0
    %v93 = vsel %vm73, %v39, 0
    %v96 = vsel %vm73, %v40, 0
    %v99 = vsel %vm73, %v41, 0
    %v102 = vsel %vm73, %v42, 0
    %v105 = vsel %vm73, %v43, 0
    %v108 = vsel %vm73, %v44, 0
    %110 = vmatprep.subr.bf16.mxu0 0
    %111 = vmatpush1.bf16.xpose.msra.mxu0 %v87
    %112 = vmatprep.subr.bf16.mxu0 0
    %113 = vmatpush1.bf16.xpose.msra.mxu0 %v90
    %114 = vmatprep.subr.bf16.mxu0 0
    %115 = vmatpush1.bf16.xpose.msra.mxu0 %v93
    %116 = vmatprep.subr.bf16.mxu0 0
    %117 = vmatpush1.bf16.xpose.msra.mxu0 %v96
    %118 = vmatprep.subr.bf16.mxu0 0
    %119 = vmatpush1.bf16.xpose.msra.mxu0 %v99
    %120 = vmatprep.subr.bf16.mxu0 0
    %121 = vmatpush1.bf16.xpose.msra.mxu0 %v102
    %122 = vmatprep.subr.bf16.mxu0 0
    %123 = vmatpush1.bf16.xpose.msra.mxu0 %v105
    %124 = vmatprep.subr.bf16.mxu0 0
    %125 = vmatpush1.bf16.xpose.msra.mxu0 %v108
    %126 = vmatprep.subr.bf16.mxu0 0
    %127 = vmatpush1.bf16.xpose.msra.mxu0 0
    %128 = vmatprep.subr.bf16.mxu0 0
    %129 = vmatpush1.bf16.xpose.msra.mxu0 0
    %130 = vmatprep.subr.bf16.mxu0 0
    %131 = vmatpush1.bf16.xpose.msra.mxu0 0
    %132 = vmatprep.subr.bf16.mxu0 0
    %133 = vmatpush1.bf16.xpose.msra.mxu0 0
    %134 = vmatprep.subr.bf16.mxu0 0
    %135 = vmatpush1.bf16.xpose.msra.mxu0 0
    %136 = vmatprep.subr.bf16.mxu0 0
    %137 = vmatpush1.bf16.xpose.msra.mxu0 0
    %138 = vmatprep.subr.bf16.mxu0 0
    %139 = vmatpush1.bf16.xpose.msra.mxu0 0
    %140 = vmatprep.subr.bf16.mxu0 0
    %141 = vmatpush1.bf16.xpose.msra.mxu0 0
    %142 = vmatprep.mubr.bf16.mxu0 0
    %143 = vmatmul.mubr.bf16.gmra.mrb[0].mxu0 %v75
    %v144 = vpop.f32.mrb[0].mxu0
    %v145 = vadd.f32 0.0, %v144
    %v146 = vpop.f32.mrb[0].mxu0
    %v147 = vpop.f32.mrb[0].mxu0
    %v148 = vadd.f32 0.0, %v147
    %v149 = vpop.f32.mrb[0].mxu0
    %150 = vmatprep.mubr.bf16.mxu0 0
    %151 = vmatmul.mubr.bf16.gmra.mrb[0].mxu0 %v78
    %v152 = vpop.f32.mrb[0].mxu0
    %v153 = vadd.f32 0.0, %v152
    %v154 = vpop.f32.mrb[0].mxu0
    %v155 = vpop.f32.mrb[0].mxu0
    %v156 = vadd.f32 0.0, %v155
    %v157 = vpop.f32.mrb[0].mxu0
    %158 = vmatprep.mubr.bf16.mxu0 0
    %159 = vmatmul.mubr.bf16.gmra.mrb[0].mxu0 %v81
    %v160 = vpop.f32.mrb[0].mxu0
    %v161 = vadd.f32 0.0, %v160
    %v162 = vpop.f32.mrb[0].mxu0
    %v163 = vpop.f32.mrb[0].mxu0
    %v164 = vadd.f32 0.0, %v163
    %v165 = vpop.f32.mrb[0].mxu0
    %166 = vmatprep.mubr.bf16.mxu0 0
    %167 = vmatmul.mubr.bf16.gmra.mrb[0].mxu0 %v84
    %v168 = vpop.f32.mrb[0].mxu0
    %v169 = vadd.f32 0.0, %v168
    %v170 = vpop.f32.mrb[0].mxu0
    %v171 = vpop.f32.mrb[0].mxu0
    %v172 = vadd.f32 0.0, %v171
    %v173 = vpop.f32.mrb[0].mxu0
    %174 = vdwg.mxu0
    %v175 = vstv %s20
    %v176 = vmul.f32 %v145, %v175
    %v177 = vmul.f32 %v148, %v175
    %v178 = vmul.f32 %v153, %v175
    %v179 = vmul.f32 %v156, %v175
    %v180 = vmul.f32 %v161, %v175
    %v181 = vmul.f32 %v164, %v175
    %v182 = vmul.f32 %v169, %v175
    %v183 = vmul.f32 %v172, %v175
    %v184 = vld [vmem:[%s3] sm:$0xff]
    %v185 = vld [vmem:[%s3 + $0x8] sm:$0xff]
    %v186 = vld [vmem:[%s3 + $0x10] sm:$0xff]
    %v187 = vld [vmem:[%s3 + $0x18] sm:$0xff]
    %v188 = vld [vmem:[%s3 + $0x20] sm:$0xff]
    %v189 = vld [vmem:[%s3 + $0x28] sm:$0xff]
    %v190 = vld [vmem:[%s3 + $0x30] sm:$0xff]
    %v191 = vld [vmem:[%s3 + $0x38] sm:$0xff]
    %193 = vset.pattern.permute.xlu0 0
    %194 = vperm.xlu0 %193, %v184
    %v195 = vpop.permute.xlu0 %194
    %198 = vset.pattern.permute.xlu0 0
    %199 = vperm.xlu0 %198, %v185
    %v200 = vpop.permute.xlu0 %199
    %203 = vset.pattern.permute.xlu0 0
    %204 = vperm.xlu0 %203, %v186
    %v205 = vpop.permute.xlu0 %204
    %208 = vset.pattern.permute.xlu0 0
    %209 = vperm.xlu0 %208, %v187
    %v210 = vpop.permute.xlu0 %209
    %213 = vset.pattern.permute.xlu0 0
    %214 = vperm.xlu0 %213, %v188
    %v215 = vpop.permute.xlu0 %214
    %218 = vset.pattern.permute.xlu0 0
    %219 = vperm.xlu0 %218, %v189
    %v220 = vpop.permute.xlu0 %219
    %223 = vset.pattern.permute.xlu0 0
    %224 = vperm.xlu0 %223, %v190
    %v225 = vpop.permute.xlu0 %224
    %228 = vset.pattern.permute.xlu0 0
    %229 = vperm.xlu0 %228, %v191
    %v230 = vpop.permute.xlu0 %229
    %v232 = vadd.f32 %v176, %v195
    %v233 = vadd.f32 %v177, %v200
    %v234 = vadd.f32 %v178, %v205
    %v235 = vadd.f32 %v179, %v210
    %v236 = vadd.f32 %v180, %v215
    %v237 = vadd.f32 %v181, %v220
    %v238 = vadd.f32 %v182, %v225
    %v239 = vadd.f32 %v183, %v230
    %v240 = vround.ne.pseudo %v232
    %v241 = vround.ne.pseudo %v233
    %v242 = vround.ne.pseudo %v234
    %v243 = vround.ne.pseudo %v235
    %v244 = vround.ne.pseudo %v236
    %v245 = vround.ne.pseudo %v237
    %v246 = vround.ne.pseudo %v238
    %v247 = vround.ne.pseudo %v239
    %v248 = vmax.f32 %v240, 0.0
    %v249 = vmax.f32 %v241, 0.0
    %v250 = vmax.f32 %v242, 0.0
    %v251 = vmax.f32 %v243, 0.0
    %v252 = vmax.f32 %v244, 0.0
    %v253 = vmax.f32 %v245, 0.0
    %v254 = vmax.f32 %v246, 0.0
    %v255 = vmax.f32 %v247, 0.0
    %v256 = vmin.f32 %v248, 255.0
    %v257 = vmin.f32 %v249, 255.0
    %v258 = vmin.f32 %v250, 255.0
    %v259 = vmin.f32 %v251, 255.0
    %v260 = vmin.f32 %v252, 255.0
    %v261 = vmin.f32 %v253, 255.0
    %v262 = vmin.f32 %v254, 255.0
    %v263 = vmin.f32 %v255, 255.0
    %v264 = vpack.c.bf16 %v257, %v256
    %v265 = vpack.c.bf16 %v259, %v258
    %v266 = vpack.c.bf16 %v261, %v260
    %v267 = vpack.c.bf16 %v263, %v262
    %v272 = vunpack.c.l.b16 %v264
    %v273 = vunpack.c.h.b16 %v264
    %v274 = vunpack.c.l.b16 %v265
    %v275 = vunpack.c.h.b16 %v265
    %v276 = vunpack.c.l.b16 %v266
    %v277 = vunpack.c.h.b16 %v266
    %v278 = vunpack.c.l.b16 %v267
    %v279 = vunpack.c.h.b16 %v267
    %v280 = vpack.c.b16 %v272, %v272
    %v281 = vpack.c.b16 %v273, %v273
    %v282 = vpack.c.b16 %v274, %v274
    %v283 = vpack.c.b16 %v275, %v275
    %v284 = vpack.c.b16 %v276, %v276
    %v285 = vpack.c.b16 %v277, %v277
    %v286 = vpack.c.b16 %v278, %v278
    %v287 = vpack.c.b16 %v279, %v279
    %296 = vst [vmem:[#allocation3] sm:$0xf] %v280
    %297 = vst [vmem:[#allocation3 + $0x4] sm:$0xf] %v281
    %298 = vst [vmem:[#allocation3 + $0x8] sm:$0xf] %v282
    %299 = vst [vmem:[#allocation3 + $0xc] sm:$0xf] %v283
    %300 = vst [vmem:[#allocation3 + $0x10] sm:$0xf] %v284
    %301 = vst [vmem:[#allocation3 + $0x14] sm:$0xf] %v285
    %302 = vst [vmem:[#allocation3 + $0x18] sm:$0xf] %v286
    %303 = vst [vmem:[#allocation3 + $0x1c] sm:$0xf] %v287
    // Predicated region
    $region18: #{tpu_custom_call.1} parent=1 // pred_check
      _
    $region19: #{tpu_custom_call.1} parent=1 // pred_check_branch
      %305 = sbr.rel (0) target = $region21
    $region20: #{tpu_custom_call.1} parent=1 // pred_region
      %s307 = ssub.s32 512, 512
      %308 = vsyncadd [#allocation4], %s307
      %s309 = sshll.u32 [#allocation3], 4
      %s310 = int_to_ptr.vmem [resolvable:$true] %s309
      %315 = dma.vmem_to_hbm [thread:$0]  %s310, 512, %s4, [#allocation4], 64, 64, 4
    $region21: #{tpu_custom_call.1} parent=1 // pred_fallthru
      _
    // Predicated region
    $region22: #{tpu_custom_call.1} parent=1 // pred_check
      _
    $region23: #{tpu_custom_call.1} parent=1 // pred_check_branch
      %317 = sbr.rel (0) target = $region25
    $region24: #{tpu_custom_call.1} parent=1 // pred_region
      %318 = dma.done [#allocation4], 512
    $region25: #{tpu_custom_call.1} parent=1 // pred_fallthru
      _
    %319 = vsyncpa [#allocation4], 1

</llo_original>
